<compile_context>
chip_gen: v6e
topology: v6e:2x2x1
jax: 0.10.0
libtpu: 0.0.40
codegen_flags: <defaults>
</compile_context>

<pallas_src>
import math

import jax
import jax.numpy as jnp
from jax.experimental import pallas as pl
from jax.experimental.pallas import tpu as pltpu


def _is_v5e():
    try:
        kind = jax.devices()[0].device_kind.lower()
    except Exception:
        return False
    return ("v5 lite" in kind) or ("v5e" in kind) or ("v5litepod" in kind)


def _vmem_budget_bytes():
    cap = None
    try:
        cap = getattr(pltpu.get_tpu_info(), "vmem_capacity_bytes", None)
    except Exception:
        cap = None
    if not cap:
        cap = 64 * 1024 * 1024  # conservative fallback: v7x per-TC physical VMEM
    # Leave headroom; never request more than ~96 MiB scoped VMEM.
    return int(min(cap * 3 // 4, 96 * 1024 * 1024))


def _choose_packing(n_feats, n_states, max_packed_feats):
    """Largest P with (P*F) % 128 == 0, P*F <= max_packed_feats, P*S <= 128."""
    best = 1
    p = 1
    while p * n_states <= 128 and p * n_feats <= max_packed_feats:
        if (p * n_feats) % 128 == 0:
            best = p
        p += 1
    return best


def _log_prob_kernel(x_ref, w1_ref, w2_ref, c_ref, o_ref):
    x = x_ref[...]                                                         # (TG, P*F) f32
    acc = jnp.dot(x * x, w1_ref[...], preferred_element_type=jnp.float32)  # (TG, P*S)
    acc = acc + jnp.dot(x, w2_ref[...], preferred_element_type=jnp.float32)
    o_ref[...] = (acc + c_ref[...]).astype(o_ref.dtype)


def diag_gaussian_log_prob(x, mu, sigma):
    """x: (N, F), mu/sigma: (S, F)  ->  (N, S) log probs (float32)."""
    N, F = x.shape
    S, F2 = mu.shape
    assert F == F2 and sigma.shape == (S, F)

    if x.dtype != jnp.float32:
        x = x.astype(jnp.float32)
    mu = mu.astype(jnp.float32)
    sigma = sigma.astype(jnp.float32)

    # ---- parameter-only precompute (tiny S x F XLA ops, done once) ---------
    inv_sigma = 1.0 / sigma
    w1 = (-0.5 * inv_sigma).T                                  # (F, S)
    w2 = (mu * inv_sigma).T                                    # (F, S)
    c = (-0.5 * (F * math.log(2.0 * math.pi)
                 + jnp.sum(mu * mu * inv_sigma, axis=1))
         - 0.5 * jnp.sum(jnp.log(sigma), axis=1))[None, :]     # (1, S)

    # ---- row packing: x (N,F) -> (N/P, P*F), block-diagonal weights --------
    max_packed_feats = 256 if _is_v5e() else 512
    P = _choose_packing(F, S, max_packed_feats)

    if P > 1:
        eye = jnp.eye(P, dtype=jnp.float32)
        w1 = (eye[:, None, :, None] * w1[None, :, None, :]).reshape(P * F, P * S)
        w2 = (eye[:, None, :, None] * w2[None, :, None, :]).reshape(P * F, P * S)
        c = jnp.tile(c, (1, P))                                # (1, P*S)

    rem = N % P
    if rem:
        # TODO(synk): this whole-array pad copies x in HBM; callers that care
        # should supply N % P == 0 (or route the <P tail rows separately) to
        # keep the packed path copy-free.
        x = jnp.pad(x, ((0, P - rem), (0, 0)))
    n_padded = x.shape[0]
    G = n_padded // P                       # packed rows ("groups")
    PF, PS = P * F, P * S
    xp = x.reshape(G, PF)                   # free row-major reinterpretation

    # ---- tile selection from an explicit VMEM budget ------------------------
    budget = _vmem_budget_bytes()
    per_group_bytes = 4 * (PF + PS)                   # one buffered x row + out row
    weight_bytes = 4 * 2 * (2 * PF * PS + PS)         # W1, W2, c (double-buffered)
    max_groups = max(8, (budget - weight_bytes) // (2 * per_group_bytes))

    knee_g = max(8, pl.cdiv(4096, P))                 # ~4K rows/step amortizes overhead
    tile_g = min(G, max_groups)
    if tile_g >= 2 * knee_g and pl.cdiv(G, tile_g) < 8:
        # Split into a few steps for 2-TC load balance, but never below the knee.
        tile_g = max(knee_g, pl.cdiv(G, 8))
    if tile_g < G:
        tile_g = max(8, (tile_g // 8) * 8)            # partial-block rule: multiple of 8

    grid = (pl.cdiv(G, tile_g),)

    out_packed = pl.pallas_call(
        _log_prob_kernel,
        out_shape=jax.ShapeDtypeStruct((G, PS), jnp.float32),
        grid_spec=pltpu.PrefetchScalarGridSpec(
            num_scalar_prefetch=0,
            grid=grid,
            in_specs=[
                pl.BlockSpec((tile_g, PF), lambda i: (i, 0)),  # x tile (streamed)
                pl.BlockSpec((PF, PS), lambda i: (0, 0)),      # W1 (resident)
                pl.BlockSpec((PF, PS), lambda i: (0, 0)),      # W2 (resident)
                pl.BlockSpec((1, PS), lambda i: (0, 0)),       # bias (resident)
            ],
            out_specs=pl.BlockSpec((tile_g, PS), lambda i: (i, 0)),
        ),
        compiler_params=pltpu.CompilerParams(
            dimension_semantics=("parallel",),
            vmem_limit_bytes=budget,
        ),
    )(xp, w1, w2, c)

    # (G, P*S) -> (n_padded, S) is again a free row-major reshape.
    return out_packed.reshape(n_padded, S)[:N]


def reference_log_prob(x, mu, sigma):
    # Plain-JAX mirror of the PyTorch log_prob for validation.
    precisions = jax.lax.rsqrt(sigma)                                    # (S, F)
    xe = x[:, None, :]                                                   # (N, 1, F)
    me = mu[None, :, :]                                                  # (1, S, F)
    pe = precisions[None, :, :]                                          # (1, S, F)
    exp_term = jnp.sum((me * me + xe * xe - 2 * xe * me) * pe ** 2, axis=2)  # (N, S)
    log_det = jnp.sum(jnp.log(precisions), axis=1)[None, :]                  # (1, S)
    F = x.shape[1]
    return -0.5 * (F * math.log(2 * math.pi) + exp_term) + log_det


if __name__ == "__main__":
    key = jax.random.PRNGKey(0)
    k_mu, k_sigma, k_x1, k_x2 = jax.random.split(key, 4)

    F, S = 32, 8  # n_feats, n_states
    mu = jax.random.normal(k_mu, (S, F), dtype=jnp.float32)
    # reset_parameters default is sigma = 1; perturb so precision/log-det
    # paths are actually exercised.
    sigma = 1.0 + 0.5 * jax.random.uniform(k_sigma, (S, F), dtype=jnp.float32)

    # Path 1: N a multiple of the packing factor (copy-free packed fast path).
    N1 = 512
    x1 = jax.random.normal(k_x1, (N1, F), dtype=jnp.float32)
    out1 = jax.block_until_ready(diag_gaussian_log_prob(x1, mu, sigma))
    ref1 = reference_log_prob(x1, mu, sigma)
    assert out1.shape == (N1, S)
    assert jnp.allclose(out1, ref1, rtol=1e-4, atol=1e-4), (
        f"max abs err (N={N1}) = {jnp.max(jnp.abs(out1 - ref1))}")

    # Path 2: ragged N (tiny tail pad + partial-block handling).
    N2 = 130
    x2 = jax.random.normal(k_x2, (N2, F), dtype=jnp.float32)
    out2 = jax.block_until_ready(diag_gaussian_log_prob(x2, mu, sigma))
    ref2 = reference_log_prob(x2, mu, sigma)
    assert out2.shape == (N2, S)
    assert jnp.allclose(out2, ref2, rtol=1e-4, atol=1e-4), (
        f"max abs err (N={N2}) = {jnp.max(jnp.abs(out2 - ref2))}")

    print("KERNEL_OK")
</pallas_src>

<mosaic_0001>
module attributes {stable_mosaic.version = 11 : i64} {
  func.func @_log_prob_kernel(%arg0: i32, %arg1: memref<32x512xf32, #tpu.memory_space<vmem>>, %arg2: memref<512x128xf32, #tpu.memory_space<vmem>>, %arg3: memref<512x128xf32, #tpu.memory_space<vmem>>, %arg4: memref<1x128xf32, #tpu.memory_space<vmem>>, %arg5: memref<32x128xf32, #tpu.memory_space<vmem>>) attributes {dimension_semantics = [#tpu.dimension_semantics<parallel>], iteration_bounds = array<i64: 1>, scalar_prefetch = 0 : i64, scratch_operands = 0 : i64, tpu.core_type = #tpu.core_type<tc>, window_params = [{transform_indices = @transform_0, window_bounds = array<i64: 32, 512>}, {pipeline_mode = #tpu.pipeline_mode<synchronous>, transform_indices = @transform_1, window_bounds = array<i64: 512, 128>}, {pipeline_mode = #tpu.pipeline_mode<synchronous>, transform_indices = @transform_2, window_bounds = array<i64: 512, 128>}, {pipeline_mode = #tpu.pipeline_mode<synchronous>, transform_indices = @transform_3, window_bounds = array<i64: 1, 128>}, {transform_indices = @transform_4, window_bounds = array<i64: 32, 128>}]} {
    %c0 = arith.constant 0 : index
    %c0_0 = arith.constant 0 : index
    %0 = vector.load %arg1[%c0, %c0_0] : memref<32x512xf32, #tpu.memory_space<vmem>>, vector<32x512xf32>
    %1 = arith.mulf %0, %0 : vector<32x512xf32>
    %c0_1 = arith.constant 0 : index
    %c0_2 = arith.constant 0 : index
    %2 = vector.load %arg2[%c0_1, %c0_2] : memref<512x128xf32, #tpu.memory_space<vmem>>, vector<512x128xf32>
    %cst = arith.constant dense<0.000000e+00> : vector<32x128xf32>
    %3 = tpu.matmul %1, %2, %cst {dimension_numbers = #tpu.dot_dimension_numbers<[1], [0], [0], [1], [0, 0, 1, 1], [], []>} : vector<32x512xf32>, vector<512x128xf32>, vector<32x128xf32> -> vector<32x128xf32>
    %c0_3 = arith.constant 0 : index
    %c0_4 = arith.constant 0 : index
    %4 = vector.load %arg3[%c0_3, %c0_4] : memref<512x128xf32, #tpu.memory_space<vmem>>, vector<512x128xf32>
    %cst_5 = arith.constant dense<0.000000e+00> : vector<32x128xf32>
    %5 = tpu.matmul %0, %4, %cst_5 {dimension_numbers = #tpu.dot_dimension_numbers<[1], [0], [0], [1], [0, 0, 1, 1], [], []>} : vector<32x512xf32>, vector<512x128xf32>, vector<32x128xf32> -> vector<32x128xf32>
    %6 = arith.addf %3, %5 : vector<32x128xf32>
    %c0_6 = arith.constant 0 : index
    %c0_7 = arith.constant 0 : index
    %7 = vector.load %arg4[%c0_6, %c0_7] : memref<1x128xf32, #tpu.memory_space<vmem>>, vector<1x128xf32>
    %8 = vector.broadcast %7 : vector<1x128xf32> to vector<32x128xf32>
    %9 = arith.addf %6, %8 : vector<32x128xf32>
    %c0_8 = arith.constant 0 : index
    %c0_9 = arith.constant 0 : index
    %10 = vector.load %arg5[%c0_8, %c0_9] : memref<32x128xf32, #tpu.memory_space<vmem>>, vector<32x128xf32>
    tpu.vector_store %arg5[%c0_8, %c0_9], %9 {strides = array<i32>} : memref<32x128xf32, #tpu.memory_space<vmem>>, vector<32x128xf32>,
    return
  }
  func.func @transform_0(%arg0: i32) -> (i32, i32) {
    %c0_i32 = arith.constant 0 : i32
    %c0_i32_0 = arith.constant 0 : i32
    return %arg0, %c0_i32 : i32, i32
  }
  func.func @transform_1(%arg0: i32) -> (i32, i32) {
    %c0_i32 = arith.constant 0 : i32
    %c0_i32_0 = arith.constant 0 : i32
    %c0_i32_1 = arith.constant 0 : i32
    return %c0_i32, %c0_i32_0 : i32, i32
  }
  func.func @transform_2(%arg0: i32) -> (i32, i32) {
    %c0_i32 = arith.constant 0 : i32
    %c0_i32_0 = arith.constant 0 : i32
    %c0_i32_1 = arith.constant 0 : i32
    return %c0_i32, %c0_i32_0 : i32, i32
  }
  func.func @transform_3(%arg0: i32) -> (i32, i32) {
    %c0_i32 = arith.constant 0 : i32
    %c0_i32_0 = arith.constant 0 : i32
    %c0_i32_1 = arith.constant 0 : i32
    return %c0_i32, %c0_i32_0 : i32, i32
  }
  func.func @transform_4(%arg0: i32) -> (i32, i32) {
    %c0_i32 = arith.constant 0 : i32
    %c0_i32_0 = arith.constant 0 : i32
    return %arg0, %c0_i32 : i32, i32
  }
}

</mosaic_0001>

<llo_original>
// kernel: tpu_custom_call.1
$region0: #{tpu_custom_call.1}
  #allocation0 [shape = 'u32[]', space=smem, size = 0x4, offset = 0x4, fixed_abs, tag = 'smem constant byte address 0x4 - core index']
  #allocation1 [shape = 'u32[144,128]{1,0:T(1,128)}', space=vmem, size = 0x12000, scoped, tag = 'internal scratch']
  %s0 = inlined_call_operand.hbm [shape: f32[32,512], index: 0, kind: input, shape index: {}]
  %s1 = inlined_call_operand.hbm [shape: f32[512,128], index: 1, kind: input, shape index: {}]
  %s2 = inlined_call_operand.hbm [shape: f32[512,128], index: 2, kind: input, shape index: {}]
  %s3 = inlined_call_operand.vmem [shape: f32[1,128], index: 3, kind: input, shape index: {}]
  %s4 = inlined_call_operand.hbm [shape: f32[32,128], index: 4, kind: output, shape index: {}]
  %s5 = sld [smem:[#allocation0]]
  $region38: #{tpu_custom_call.1} parent=0
    _
  %s7 = ssub.s32 1, %s5
  %s8 = scalar_select 0, %s7, %s5
  $region1: #{tpu_custom_call.1} parent=0
    #allocation2 [shape = 'u8[65536]{0}', space=vmem, size = 0x10000, scoped, tag = 'input window, operand 0, single buffered']
    #allocation3 [shape = 's32[1]{0}', space=sflag, size = 0x4, scoped, tag = 'scoped memory for tpu_custom_call.1']
    #allocation4 [shape = 's32[1]{0}', space=sflag, size = 0x4, scoped, tag = 'scoped memory for tpu_custom_call.1']
    #allocation5 [shape = 'u8[262144]{0}', space=vmem, size = 0x40000, scoped, tag = 'input window, operand 1, single buffered']
    #allocation6 [shape = 's32[1]{0}', space=sflag, size = 0x4, scoped, tag = 'scoped memory for tpu_custom_call.1']
    #allocation7 [shape = 'u8[262144]{0}', space=vmem, size = 0x40000, scoped, tag = 'input window, operand 2, single buffered']
    #allocation8 [shape = 'u8[16384]{0}', space=vmem, size = 0x4000, scoped, tag = 'output window, operand 0, single buffered']
    %9 = vsyncpa [#allocation3], 0
    %10 = vsyncpa [#allocation6], 0
    %11 = vsyncpa [#allocation4], 0
    // Predicated region
    $region2: #{tpu_custom_call.1} parent=1 // pred_check
      _
    $region3: #{tpu_custom_call.1} parent=1 // pred_check_branch
      %13 = sbr.rel (0) target = $region5
    $region4: #{tpu_custom_call.1} parent=1 // pred_region
      %s15 = ssub.s32 2048, 2048
      %16 = vsyncadd [#allocation3], %s15
      %s17 = sshll.u32 [#allocation2], 4
      %s18 = int_to_ptr.vmem [resolvable:$true] %s17
      %23 = dma.hbm_to_vmem [thread:$0]  %s0, 2048, %s18, [#allocation3], 512, 512, 32
    $region5: #{tpu_custom_call.1} parent=1 // pred_fallthru
      _
    // Predicated region
    $region6: #{tpu_custom_call.1} parent=1 // pred_check
      _
    $region7: #{tpu_custom_call.1} parent=1 // pred_check_branch
      %25 = sbr.rel (0) target = $region9
    $region8: #{tpu_custom_call.1} parent=1 // pred_region
      %s27 = ssub.s32 8192, 8192
      %28 = vsyncadd [#allocation6], %s27
      %s29 = sshll.u32 [#allocation5], 4
      %s30 = int_to_ptr.vmem [resolvable:$true] %s29
      %35 = dma.hbm_to_vmem [thread:$0]  %s1, 8192, %s30, [#allocation6], 128, 128, 8
    $region9: #{tpu_custom_call.1} parent=1 // pred_fallthru
      _
    // Predicated region
    $region10: #{tpu_custom_call.1} parent=1 // pred_check
      _
    $region11: #{tpu_custom_call.1} parent=1 // pred_check_branch
      %37 = sbr.rel (0) target = $region13
    $region12: #{tpu_custom_call.1} parent=1 // pred_region
      %s39 = ssub.s32 8192, 8192
      %40 = vsyncadd [#allocation6], %s39
      %s41 = sshll.u32 [#allocation7], 4
      %s42 = int_to_ptr.vmem [resolvable:$true] %s41
      %47 = dma.hbm_to_vmem [thread:$0]  %s2, 8192, %s42, [#allocation6], 128, 128, 8
    $region13: #{tpu_custom_call.1} parent=1 // pred_fallthru
      _
    // Predicated region
    $region14: #{tpu_custom_call.1} parent=1 // pred_check
      _
    $region15: #{tpu_custom_call.1} parent=1 // pred_check_branch
      %49 = sbr.rel (0) target = $region17
    $region16: #{tpu_custom_call.1} parent=1 // pred_region
      _
    $region17: #{tpu_custom_call.1} parent=1 // pred_fallthru
      _
    // Predicated region
    $region18: #{tpu_custom_call.1} parent=1 // pred_check
      _
    $region19: #{tpu_custom_call.1} parent=1 // pred_check_branch
      %51 = sbr.rel (0) target = $region21
    $region20: #{tpu_custom_call.1} parent=1 // pred_region
      %52 = dma.done [#allocation3], 2048
    $region21: #{tpu_custom_call.1} parent=1 // pred_fallthru
      _
    // Predicated region
    $region22: #{tpu_custom_call.1} parent=1 // pred_check
      _
    $region23: #{tpu_custom_call.1} parent=1 // pred_check_branch
      %54 = sbr.rel (0) target = $region25
    $region24: #{tpu_custom_call.1} parent=1 // pred_region
      %55 = dma.done [#allocation6], 8192
    $region25: #{tpu_custom_call.1} parent=1 // pred_fallthru
      _
    // Predicated region
    $region26: #{tpu_custom_call.1} parent=1 // pred_check
      _
    $region27: #{tpu_custom_call.1} parent=1 // pred_check_branch
      %57 = sbr.rel (0) target = $region29
    $region28: #{tpu_custom_call.1} parent=1 // pred_region
      %58 = dma.done [#allocation6], 8192
    $region29: #{tpu_custom_call.1} parent=1 // pred_fallthru
      _
    %v59 = vld [vmem:[#allocation2] sm:$0xff]
    %v60 = vld [vmem:[#allocation2 + $0x8] sm:$0xff]
    %v61 = vld [vmem:[#allocation2 + $0x10] sm:$0xff]
    %v62 = vld [vmem:[#allocation2 + $0x18] sm:$0xff]
    %v63 = vld [vmem:[#allocation2 + $0x20] sm:$0xff]
    %v64 = vld [vmem:[#allocation2 + $0x28] sm:$0xff]
    %v65 = vld [vmem:[#allocation2 + $0x30] sm:$0xff]
    %v66 = vld [vmem:[#allocation2 + $0x38] sm:$0xff]
    %v67 = vld [vmem:[#allocation2 + $0x40] sm:$0xff]
    %v68 = vld [vmem:[#allocation2 + $0x48] sm:$0xff]
    %v69 = vld [vmem:[#allocation2 + $0x50] sm:$0xff]
    %v70 = vld [vmem:[#allocation2 + $0x58] sm:$0xff]
    %v71 = vld [vmem:[#allocation2 + $0x60] sm:$0xff]
    %v72 = vld [vmem:[#allocation2 + $0x68] sm:$0xff]
    %v73 = vld [vmem:[#allocation2 + $0x70] sm:$0xff]
    %v74 = vld [vmem:[#allocation2 + $0x78] sm:$0xff]
    %v75 = vmul.f32 %v59, %v59
    %v76 = vmul.f32 %v60, %v60
    %v77 = vmul.f32 %v61, %v61
    %v78 = vmul.f32 %v62, %v62
    %v79 = vmul.f32 %v63, %v63
    %v80 = vmul.f32 %v64, %v64
    %v81 = vmul.f32 %v65, %v65
    %v82 = vmul.f32 %v66, %v66
    %v83 = vmul.f32 %v67, %v67
    %v84 = vmul.f32 %v68, %v68
    %v85 = vmul.f32 %v69, %v69
    %v86 = vmul.f32 %v70, %v70
    %v87 = vmul.f32 %v71, %v71
    %v88 = vmul.f32 %v72, %v72
    %v89 = vmul.f32 %v73, %v73
    %v90 = vmul.f32 %v74, %v74
    %v91 = vld [vmem:[#allocation5] sm:$0xff]
    %v92 = vld [vmem:[#allocation5 + $0x8] sm:$0xff]
    %v93 = vld [vmem:[#allocation5 + $0x10] sm:$0xff]
    %v94 = vld [vmem:[#allocation5 + $0x18] sm:$0xff]
    %v95 = vld [vmem:[#allocation5 + $0x20] sm:$0xff]
    %v96 = vld [vmem:[#allocation5 + $0x28] sm:$0xff]
    %v97 = vld [vmem:[#allocation5 + $0x30] sm:$0xff]
    %v98 = vld [vmem:[#allocation5 + $0x38] sm:$0xff]
    %v99 = vld [vmem:[#allocation5 + $0x40] sm:$0xff]
    %v100 = vld [vmem:[#allocation5 + $0x48] sm:$0xff]
    %v101 = vld [vmem:[#allocation5 + $0x50] sm:$0xff]
    %v102 = vld [vmem:[#allocation5 + $0x58] sm:$0xff]
    %v103 = vld [vmem:[#allocation5 + $0x60] sm:$0xff]
    %v104 = vld [vmem:[#allocation5 + $0x68] sm:$0xff]
    %v105 = vld [vmem:[#allocation5 + $0x70] sm:$0xff]
    %v106 = vld [vmem:[#allocation5 + $0x78] sm:$0xff]
    %v107 = vld [vmem:[#allocation5 + $0x80] sm:$0xff]
    %v108 = vld [vmem:[#allocation5 + $0x88] sm:$0xff]
    %v109 = vld [vmem:[#allocation5 + $0x90] sm:$0xff]
    %v110 = vld [vmem:[#allocation5 + $0x98] sm:$0xff]
    %v111 = vld [vmem:[#allocation5 + $0xa0] sm:$0xff]
    %v112 = vld [vmem:[#allocation5 + $0xa8] sm:$0xff]
    %v113 = vld [vmem:[#allocation5 + $0xb0] sm:$0xff]
    %v114 = vld [vmem:[#allocation5 + $0xb8] sm:$0xff]
    %v115 = vld [vmem:[#allocation5 + $0xc0] sm:$0xff]
    %v116 = vld [vmem:[#allocation5 + $0xc8] sm:$0xff]
    %v117 = vld [vmem:[#allocation5 + $0xd0] sm:$0xff]
    %v118 = vld [vmem:[#allocation5 + $0xd8] sm:$0xff]
    %v119 = vld [vmem:[#allocation5 + $0xe0] sm:$0xff]
    %v120 = vld [vmem:[#allocation5 + $0xe8] sm:$0xff]
    %v121 = vld [vmem:[#allocation5 + $0xf0] sm:$0xff]
    %v122 = vld [vmem:[#allocation5 + $0xf8] sm:$0xff]
    %v123 = vld [vmem:[#allocation5 + $0x100] sm:$0xff]
    %v124 = vld [vmem:[#allocation5 + $0x108] sm:$0xff]
    %v125 = vld [vmem:[#allocation5 + $0x110] sm:$0xff]
    %v126 = vld [vmem:[#allocation5 + $0x118] sm:$0xff]
    %v127 = vld [vmem:[#allocation5 + $0x120] sm:$0xff]
    %v128 = vld [vmem:[#allocation5 + $0x128] sm:$0xff]
    %v129 = vld [vmem:[#allocation5 + $0x130] sm:$0xff]
    %v130 = vld [vmem:[#allocation5 + $0x138] sm:$0xff]
    %v131 = vld [vmem:[#allocation5 + $0x140] sm:$0xff]
    %v132 = vld [vmem:[#allocation5 + $0x148] sm:$0xff]
    %v133 = vld [vmem:[#allocation5 + $0x150] sm:$0xff]
    %v134 = vld [vmem:[#allocation5 + $0x158] sm:$0xff]
    %v135 = vld [vmem:[#allocation5 + $0x160] sm:$0xff]
    %v136 = vld [vmem:[#allocation5 + $0x168] sm:$0xff]
    %v137 = vld [vmem:[#allocation5 + $0x170] sm:$0xff]
    %v138 = vld [vmem:[#allocation5 + $0x178] sm:$0xff]
    %v139 = vld [vmem:[#allocation5 + $0x180] sm:$0xff]
    %v140 = vld [vmem:[#allocation5 + $0x188] sm:$0xff]
    %v141 = vld [vmem:[#allocation5 + $0x190] sm:$0xff]
    %v142 = vld [vmem:[#allocation5 + $0x198] sm:$0xff]
    %v143 = vld [vmem:[#allocation5 + $0x1a0] sm:$0xff]
    %v144 = vld [vmem:[#allocation5 + $0x1a8] sm:$0xff]
    %v145 = vld [vmem:[#allocation5 + $0x1b0] sm:$0xff]
    %v146 = vld [vmem:[#allocation5 + $0x1b8] sm:$0xff]
    %v147 = vld [vmem:[#allocation5 + $0x1c0] sm:$0xff]
    %v148 = vld [vmem:[#allocation5 + $0x1c8] sm:$0xff]
    %v149 = vld [vmem:[#allocation5 + $0x1d0] sm:$0xff]
    %v150 = vld [vmem:[#allocation5 + $0x1d8] sm:$0xff]
    %v151 = vld [vmem:[#allocation5 + $0x1e0] sm:$0xff]
    %v152 = vld [vmem:[#allocation5 + $0x1e8] sm:$0xff]
    %v153 = vld [vmem:[#allocation5 + $0x1f0] sm:$0xff]
    %v154 = vld [vmem:[#allocation5 + $0x1f8] sm:$0xff]
    %v155 = vld [vmem:[#allocation7] sm:$0xff]
    %v156 = vld [vmem:[#allocation7 + $0x8] sm:$0xff]
    %v157 = vld [vmem:[#allocation7 + $0x10] sm:$0xff]
    %v158 = vld [vmem:[#allocation7 + $0x18] sm:$0xff]
    %v159 = vld [vmem:[#allocation7 + $0x20] sm:$0xff]
    %v160 = vld [vmem:[#allocation7 + $0x28] sm:$0xff]
    %v161 = vld [vmem:[#allocation7 + $0x30] sm:$0xff]
    %v162 = vld [vmem:[#allocation7 + $0x38] sm:$0xff]
    %v163 = vld [vmem:[#allocation7 + $0x40] sm:$0xff]
    %v164 = vld [vmem:[#allocation7 + $0x48] sm:$0xff]
    %v165 = vld [vmem:[#allocation7 + $0x50] sm:$0xff]
    %v166 = vld [vmem:[#allocation7 + $0x58] sm:$0xff]
    %v167 = vld [vmem:[#allocation7 + $0x60] sm:$0xff]
    %v168 = vld [vmem:[#allocation7 + $0x68] sm:$0xff]
    %v169 = vld [vmem:[#allocation7 + $0x70] sm:$0xff]
    %v170 = vld [vmem:[#allocation7 + $0x78] sm:$0xff]
    %v171 = vld [vmem:[#allocation7 + $0x80] sm:$0xff]
    %v172 = vld [vmem:[#allocation7 + $0x88] sm:$0xff]
    %v173 = vld [vmem:[#allocation7 + $0x90] sm:$0xff]
    %v174 = vld [vmem:[#allocation7 + $0x98] sm:$0xff]
    %v175 = vld [vmem:[#allocation7 + $0xa0] sm:$0xff]
    %v176 = vld [vmem:[#allocation7 + $0xa8] sm:$0xff]
    %v177 = vld [vmem:[#allocation7 + $0xb0] sm:$0xff]
    %v178 = vld [vmem:[#allocation7 + $0xb8] sm:$0xff]
    %v179 = vld [vmem:[#allocation7 + $0xc0] sm:$0xff]
    %v180 = vld [vmem:[#allocation7 + $0xc8] sm:$0xff]
    %v181 = vld [vmem:[#allocation7 + $0xd0] sm:$0xff]
    %v182 = vld [vmem:[#allocation7 + $0xd8] sm:$0xff]
    %v183 = vld [vmem:[#allocation7 + $0xe0] sm:$0xff]
    %v184 = vld [vmem:[#allocation7 + $0xe8] sm:$0xff]
    %v185 = vld [vmem:[#allocation7 + $0xf0] sm:$0xff]
    %v186 = vld [vmem:[#allocation7 + $0xf8] sm:$0xff]
    %v187 = vld [vmem:[#allocation7 + $0x100] sm:$0xff]
    %v188 = vld [vmem:[#allocation7 + $0x108] sm:$0xff]
    %v189 = vld [vmem:[#allocation7 + $0x110] sm:$0xff]
    %v190 = vld [vmem:[#allocation7 + $0x118] sm:$0xff]
    %v191 = vld [vmem:[#allocation7 + $0x120] sm:$0xff]
    %v192 = vld [vmem:[#allocation7 + $0x128] sm:$0xff]
    %v193 = vld [vmem:[#allocation7 + $0x130] sm:$0xff]
    %v194 = vld [vmem:[#allocation7 + $0x138] sm:$0xff]
    %v195 = vld [vmem:[#allocation7 + $0x140] sm:$0xff]
    %v196 = vld [vmem:[#allocation7 + $0x148] sm:$0xff]
    %v197 = vld [vmem:[#allocation7 + $0x150] sm:$0xff]
    %v198 = vld [vmem:[#allocation7 + $0x158] sm:$0xff]
    %v199 = vld [vmem:[#allocation7 + $0x160] sm:$0xff]
    %v200 = vld [vmem:[#allocation7 + $0x168] sm:$0xff]
    %v201 = vld [vmem:[#allocation7 + $0x170] sm:$0xff]
    %v202 = vld [vmem:[#allocation7 + $0x178] sm:$0xff]
    %v203 = vld [vmem:[#allocation7 + $0x180] sm:$0xff]
    %v204 = vld [vmem:[#allocation7 + $0x188] sm:$0xff]
    %v205 = vld [vmem:[#allocation7 + $0x190] sm:$0xff]
    %v206 = vld [vmem:[#allocation7 + $0x198] sm:$0xff]
    %v207 = vld [vmem:[#allocation7 + $0x1a0] sm:$0xff]
    %v208 = vld [vmem:[#allocation7 + $0x1a8] sm:$0xff]
    %v209 = vld [vmem:[#allocation7 + $0x1b0] sm:$0xff]
    %v210 = vld [vmem:[#allocation7 + $0x1b8] sm:$0xff]
    %v211 = vld [vmem:[#allocation7 + $0x1c0] sm:$0xff]
    %v212 = vld [vmem:[#allocation7 + $0x1c8] sm:$0xff]
    %v213 = vld [vmem:[#allocation7 + $0x1d0] sm:$0xff]
    %v214 = vld [vmem:[#allocation7 + $0x1d8] sm:$0xff]
    %v215 = vld [vmem:[#allocation7 + $0x1e0] sm:$0xff]
    %v216 = vld [vmem:[#allocation7 + $0x1e8] sm:$0xff]
    %v217 = vld [vmem:[#allocation7 + $0x1f0] sm:$0xff]
    %v218 = vld [vmem:[#allocation7 + $0x1f8] sm:$0xff]
    %219 = vmatprep.subr.mxu0 0.0
    %220 = vmatpush1.msra.mxu0 %v170
    %221 = vmatprep.subr.mxu0 0.0
    %222 = vmatpush1.msra.mxu0 %v169
    %223 = vmatprep.subr.mxu0 0.0
    %224 = vmatpush1.msra.mxu0 %v168
    %225 = vmatprep.subr.mxu0 0.0
    %226 = vmatpush1.msra.mxu0 %v167
    %227 = vmatprep.subr.mxu0 0.0
    %228 = vmatpush1.msra.mxu0 %v166
    %229 = vmatprep.subr.mxu0 0.0
    %230 = vmatpush1.msra.mxu0 %v165
    %231 = vmatprep.subr.mxu0 0.0
    %232 = vmatpush1.msra.mxu0 %v164
    %233 = vmatprep.subr.mxu0 0.0
    %234 = vmatpush1.msra.mxu0 %v163
    %235 = vmatprep.subr.mxu0 0.0
    %236 = vmatpush1.msra.mxu0 %v162
    %237 = vmatprep.subr.mxu0 0.0
    %238 = vmatpush1.msra.mxu0 %v161
    %239 = vmatprep.subr.mxu0 0.0
    %240 = vmatpush1.msra.mxu0 %v160
    %241 = vmatprep.subr.mxu0 0.0
    %242 = vmatpush1.msra.mxu0 %v159
    %243 = vmatprep.subr.mxu0 0.0
    %244 = vmatpush1.msra.mxu0 %v158
    %245 = vmatprep.subr.mxu0 0.0
    %246 = vmatpush1.msra.mxu0 %v157
    %247 = vmatprep.subr.mxu0 0.0
    %248 = vmatpush1.msra.mxu0 %v156
    %249 = vmatprep.subr.mxu0 0.0
    %250 = vmatpush1.msra.mxu0 %v155
    %251 = vmatprep.subr.mxu0 0.0
    %252 = vmatpush2.msra.mxu0 %v186
    %253 = vmatprep.subr.mxu0 0.0
    %254 = vmatpush2.msra.mxu0 %v185
    %255 = vmatprep.subr.mxu0 0.0
    %256 = vmatpush2.msra.mxu0 %v184
    %257 = vmatprep.subr.mxu0 0.0
    %258 = vmatpush2.msra.mxu0 %v183
    %259 = vmatprep.subr.mxu0 0.0
    %260 = vmatpush2.msra.mxu0 %v182
    %261 = vmatprep.subr.mxu0 0.0
    %262 = vmatpush2.msra.mxu0 %v181
    %263 = vmatprep.subr.mxu0 0.0
    %264 = vmatpush2.msra.mxu0 %v180
    %265 = vmatprep.subr.mxu0 0.0
    %266 = vmatpush2.msra.mxu0 %v179
    %267 = vmatprep.subr.mxu0 0.0
    %268 = vmatpush2.msra.mxu0 %v178
    %269 = vmatprep.subr.mxu0 0.0
    %270 = vmatpush2.msra.mxu0 %v177
    %271 = vmatprep.subr.mxu0 0.0
    %272 = vmatpush2.msra.mxu0 %v176
    %273 = vmatprep.subr.mxu0 0.0
    %274 = vmatpush2.msra.mxu0 %v175
    %275 = vmatprep.subr.mxu0 0.0
    %276 = vmatpush2.msra.mxu0 %v174
    %277 = vmatprep.subr.mxu0 0.0
    %278 = vmatpush2.msra.mxu0 %v173
    %279 = vmatprep.subr.mxu0 0.0
    %280 = vmatpush2.msra.mxu0 %v172
    %281 = vmatprep.subr.mxu0 0.0
    %282 = vmatpush2.msra.mxu0 %v171
    %283 = vmatprep.mubr.f32.mxu0 %v60
    %284 = vmatmul.mubr.f32.gmra.mxu0 %v59
    %v285 = vpop.f32.mrf.mxu0
    %v286 = vadd.f32 0.0, %v285
    %v287 = vpop.f32.mrf.mxu0
    %288 = vmatprep.mubr.f32.mxu0 %v64
    %289 = vmatmul.mubr.f32.gmra.mxu0 %v63
    %v290 = vpop.f32.mrf.mxu0
    %v291 = vadd.f32 0.0, %v290
    %v292 = vpop.f32.mrf.mxu0
    %293 = vmatprep.mubr.f32.mxu0 %v68
    %294 = vmatmul.mubr.f32.gmra.mxu0 %v67
    %v295 = vpop.f32.mrf.mxu0
    %v296 = vadd.f32 0.0, %v295
    %v297 = vpop.f32.mrf.mxu0
    %298 = vmatprep.mubr.f32.mxu0 %v72
    %299 = vmatmul.mubr.f32.gmra.mxu0 %v71
    %v300 = vpop.f32.mrf.mxu0
    %v301 = vadd.f32 0.0, %v300
    %v302 = vpop.f32.mrf.mxu0
    %303 = vdwg.mxu0
    %304 = vmatprep.subr.mxu0 0.0
    %305 = vmatpush1.msra.mxu0 %v202
    %306 = vmatprep.subr.mxu0 0.0
    %307 = vmatpush1.msra.mxu0 %v201
    %308 = vmatprep.subr.mxu0 0.0
    %309 = vmatpush1.msra.mxu0 %v200
    %310 = vmatprep.subr.mxu0 0.0
    %311 = vmatpush1.msra.mxu0 %v199
    %312 = vmatprep.subr.mxu0 0.0
    %313 = vmatpush1.msra.mxu0 %v198
    %314 = vmatprep.subr.mxu0 0.0
    %315 = vmatpush1.msra.mxu0 %v197
    %316 = vmatprep.subr.mxu0 0.0
    %317 = vmatpush1.msra.mxu0 %v196
    %318 = vmatprep.subr.mxu0 0.0
    %319 = vmatpush1.msra.mxu0 %v195
    %320 = vmatprep.subr.mxu0 0.0
    %321 = vmatpush1.msra.mxu0 %v194
    %322 = vmatprep.subr.mxu0 0.0
    %323 = vmatpush1.msra.mxu0 %v193
    %324 = vmatprep.subr.mxu0 0.0
    %325 = vmatpush1.msra.mxu0 %v192
    %326 = vmatprep.subr.mxu0 0.0
    %327 = vmatpush1.msra.mxu0 %v191
    %328 = vmatprep.subr.mxu0 0.0
    %329 = vmatpush1.msra.mxu0 %v190
    %330 = vmatprep.subr.mxu0 0.0
    %331 = vmatpush1.msra.mxu0 %v189
    %332 = vmatprep.subr.mxu0 0.0
    %333 = vmatpush1.msra.mxu0 %v188
    %334 = vmatprep.subr.mxu0 0.0
    %335 = vmatpush1.msra.mxu0 %v187
    %336 = vmatprep.subr.mxu0 0.0
    %337 = vmatpush2.msra.mxu0 %v218
    %338 = vmatprep.subr.mxu0 0.0
    %339 = vmatpush2.msra.mxu0 %v217
    %340 = vmatprep.subr.mxu0 0.0
    %341 = vmatpush2.msra.mxu0 %v216
    %342 = vmatprep.subr.mxu0 0.0
    %343 = vmatpush2.msra.mxu0 %v215
    %344 = vmatprep.subr.mxu0 0.0
    %345 = vmatpush2.msra.mxu0 %v214
    %346 = vmatprep.subr.mxu0 0.0
    %347 = vmatpush2.msra.mxu0 %v213
    %348 = vmatprep.subr.mxu0 0.0
    %349 = vmatpush2.msra.mxu0 %v212
    %350 = vmatprep.subr.mxu0 0.0
    %351 = vmatpush2.msra.mxu0 %v211
    %352 = vmatprep.subr.mxu0 0.0
    %353 = vmatpush2.msra.mxu0 %v210
    %354 = vmatprep.subr.mxu0 0.0
    %355 = vmatpush2.msra.mxu0 %v209
    %356 = vmatprep.subr.mxu0 0.0
    %357 = vmatpush2.msra.mxu0 %v208
    %358 = vmatprep.subr.mxu0 0.0
    %359 = vmatpush2.msra.mxu0 %v207
    %360 = vmatprep.subr.mxu0 0.0
    %361 = vmatpush2.msra.mxu0 %v206
    %362 = vmatprep.subr.mxu0 0.0
    %363 = vmatpush2.msra.mxu0 %v205
    %364 = vmatprep.subr.mxu0 0.0
    %365 = vmatpush2.msra.mxu0 %v204
    %366 = vmatprep.subr.mxu0 0.0
    %367 = vmatpush2.msra.mxu0 %v203
    %368 = vmatprep.mubr.f32.mxu0 %v62
    %369 = vmatmul.mubr.f32.gmra.mxu0 %v61
    %v370 = vpop.f32.mrf.mxu0
    %v371 = vadd.f32 %v286, %v370
    %v372 = vpop.f32.mrf.mxu0
    %373 = vmatprep.mubr.f32.mxu0 %v66
    %374 = vmatmul.mubr.f32.gmra.mxu0 %v65
    %v375 = vpop.f32.mrf.mxu0
    %v376 = vadd.f32 %v291, %v375
    %v377 = vpop.f32.mrf.mxu0
    %378 = vmatprep.mubr.f32.mxu0 %v70
    %379 = vmatmul.mubr.f32.gmra.mxu0 %v69
    %v380 = vpop.f32.mrf.mxu0
    %v381 = vadd.f32 %v296, %v380
    %v382 = vpop.f32.mrf.mxu0
    %383 = vmatprep.mubr.f32.mxu0 %v74
    %384 = vmatmul.mubr.f32.gmra.mxu0 %v73
    %v385 = vpop.f32.mrf.mxu0
    %v386 = vadd.f32 %v301, %v385
    %v387 = vpop.f32.mrf.mxu0
    %388 = vdwg.mxu0
    %389 = vmatprep.subr.mxu0 0.0
    %390 = vmatpush1.msra.mxu0 %v106
    %391 = vmatprep.subr.mxu0 0.0
    %392 = vmatpush1.msra.mxu0 %v105
    %393 = vmatprep.subr.mxu0 0.0
    %394 = vmatpush1.msra.mxu0 %v104
    %395 = vmatprep.subr.mxu0 0.0
    %396 = vmatpush1.msra.mxu0 %v103
    %397 = vmatprep.subr.mxu0 0.0
    %398 = vmatpush1.msra.mxu0 %v102
    %399 = vmatprep.subr.mxu0 0.0
    %400 = vmatpush1.msra.mxu0 %v101
    %401 = vmatprep.subr.mxu0 0.0
    %402 = vmatpush1.msra.mxu0 %v100
    %403 = vmatprep.subr.mxu0 0.0
    %404 = vmatpush1.msra.mxu0 %v99
    %405 = vmatprep.subr.mxu0 0.0
    %406 = vmatpush1.msra.mxu0 %v98
    %407 = vmatprep.subr.mxu0 0.0
    %408 = vmatpush1.msra.mxu0 %v97
    %409 = vmatprep.subr.mxu0 0.0
    %410 = vmatpush1.msra.mxu0 %v96
    %411 = vmatprep.subr.mxu0 0.0
    %412 = vmatpush1.msra.mxu0 %v95
    %413 = vmatprep.subr.mxu0 0.0
    %414 = vmatpush1.msra.mxu0 %v94
    %415 = vmatprep.subr.mxu0 0.0
    %416 = vmatpush1.msra.mxu0 %v93
    %417 = vmatprep.subr.mxu0 0.0
    %418 = vmatpush1.msra.mxu0 %v92
    %419 = vmatprep.subr.mxu0 0.0
    %420 = vmatpush1.msra.mxu0 %v91
    %421 = vmatprep.subr.mxu0 0.0
    %422 = vmatpush2.msra.mxu0 %v122
    %423 = vmatprep.subr.mxu0 0.0
    %424 = vmatpush2.msra.mxu0 %v121
    %425 = vmatprep.subr.mxu0 0.0
    %426 = vmatpush2.msra.mxu0 %v120
    %427 = vmatprep.subr.mxu0 0.0
    %428 = vmatpush2.msra.mxu0 %v119
    %429 = vmatprep.subr.mxu0 0.0
    %430 = vmatpush2.msra.mxu0 %v118
    %431 = vmatprep.subr.mxu0 0.0
    %432 = vmatpush2.msra.mxu0 %v117
    %433 = vmatprep.subr.mxu0 0.0
    %434 = vmatpush2.msra.mxu0 %v116
    %435 = vmatprep.subr.mxu0 0.0
    %436 = vmatpush2.msra.mxu0 %v115
    %437 = vmatprep.subr.mxu0 0.0
    %438 = vmatpush2.msra.mxu0 %v114
    %439 = vmatprep.subr.mxu0 0.0
    %440 = vmatpush2.msra.mxu0 %v113
    %441 = vmatprep.subr.mxu0 0.0
    %442 = vmatpush2.msra.mxu0 %v112
    %443 = vmatprep.subr.mxu0 0.0
    %444 = vmatpush2.msra.mxu0 %v111
    %445 = vmatprep.subr.mxu0 0.0
    %446 = vmatpush2.msra.mxu0 %v110
    %447 = vmatprep.subr.mxu0 0.0
    %448 = vmatpush2.msra.mxu0 %v109
    %449 = vmatprep.subr.mxu0 0.0
    %450 = vmatpush2.msra.mxu0 %v108
    %451 = vmatprep.subr.mxu0 0.0
    %452 = vmatpush2.msra.mxu0 %v107
    %453 = vmatprep.mubr.f32.mxu0 %v76
    %454 = vmatmul.mubr.f32.gmra.mxu0 %v75
    %v455 = vpop.f32.mrf.mxu0
    %v456 = vadd.f32 %v371, %v455
    %v457 = vpop.f32.mrf.mxu0
    %458 = vmatprep.mubr.f32.mxu0 %v80
    %459 = vmatmul.mubr.f32.gmra.mxu0 %v79
    %v460 = vpop.f32.mrf.mxu0
    %v461 = vadd.f32 %v376, %v460
    %v462 = vpop.f32.mrf.mxu0
    %463 = vmatprep.mubr.f32.mxu0 %v84
    %464 = vmatmul.mubr.f32.gmra.mxu0 %v83
    %v465 = vpop.f32.mrf.mxu0
    %v466 = vadd.f32 %v381, %v465
    %v467 = vpop.f32.mrf.mxu0
    %468 = vmatprep.mubr.f32.mxu0 %v88
    %469 = vmatmul.mubr.f32.gmra.mxu0 %v87
    %v470 = vpop.f32.mrf.mxu0
    %v471 = vadd.f32 %v386, %v470
    %v472 = vpop.f32.mrf.mxu0
    %473 = vdwg.mxu0
    %474 = vmatprep.subr.mxu0 0.0
    %475 = vmatpush1.msra.mxu0 %v138
    %476 = vmatprep.subr.mxu0 0.0
    %477 = vmatpush1.msra.mxu0 %v137
    %478 = vmatprep.subr.mxu0 0.0
    %479 = vmatpush1.msra.mxu0 %v136
    %480 = vmatprep.subr.mxu0 0.0
    %481 = vmatpush1.msra.mxu0 %v135
    %482 = vmatprep.subr.mxu0 0.0
    %483 = vmatpush1.msra.mxu0 %v134
    %484 = vmatprep.subr.mxu0 0.0
    %485 = vmatpush1.msra.mxu0 %v133
    %486 = vmatprep.subr.mxu0 0.0
    %487 = vmatpush1.msra.mxu0 %v132
    %488 = vmatprep.subr.mxu0 0.0
    %489 = vmatpush1.msra.mxu0 %v131
    %490 = vmatprep.subr.mxu0 0.0
    %491 = vmatpush1.msra.mxu0 %v130
    %492 = vmatprep.subr.mxu0 0.0
    %493 = vmatpush1.msra.mxu0 %v129
    %494 = vmatprep.subr.mxu0 0.0
    %495 = vmatpush1.msra.mxu0 %v128
    %496 = vmatprep.subr.mxu0 0.0
    %497 = vmatpush1.msra.mxu0 %v127
    %498 = vmatprep.subr.mxu0 0.0
    %499 = vmatpush1.msra.mxu0 %v126
    %500 = vmatprep.subr.mxu0 0.0
    %501 = vmatpush1.msra.mxu0 %v125
    %502 = vmatprep.subr.mxu0 0.0
    %503 = vmatpush1.msra.mxu0 %v124
    %504 = vmatprep.subr.mxu0 0.0
    %505 = vmatpush1.msra.mxu0 %v123
    %506 = vmatprep.subr.mxu0 0.0
    %507 = vmatpush2.msra.mxu0 %v154
    %508 = vmatprep.subr.mxu0 0.0
    %509 = vmatpush2.msra.mxu0 %v153
    %510 = vmatprep.subr.mxu0 0.0
    %511 = vmatpush2.msra.mxu0 %v152
    %512 = vmatprep.subr.mxu0 0.0
    %513 = vmatpush2.msra.mxu0 %v151
    %514 = vmatprep.subr.mxu0 0.0
    %515 = vmatpush2.msra.mxu0 %v150
    %516 = vmatprep.subr.mxu0 0.0
    %517 = vmatpush2.msra.mxu0 %v149
    %518 = vmatprep.subr.mxu0 0.0
    %519 = vmatpush2.msra.mxu0 %v148
    %520 = vmatprep.subr.mxu0 0.0
    %521 = vmatpush2.msra.mxu0 %v147
    %522 = vmatprep.subr.mxu0 0.0
    %523 = vmatpush2.msra.mxu0 %v146
    %524 = vmatprep.subr.mxu0 0.0
    %525 = vmatpush2.msra.mxu0 %v145
    %526 = vmatprep.subr.mxu0 0.0
    %527 = vmatpush2.msra.mxu0 %v144
    %528 = vmatprep.subr.mxu0 0.0
    %529 = vmatpush2.msra.mxu0 %v143
    %530 = vmatprep.subr.mxu0 0.0
    %531 = vmatpush2.msra.mxu0 %v142
    %532 = vmatprep.subr.mxu0 0.0
    %533 = vmatpush2.msra.mxu0 %v141
    %534 = vmatprep.subr.mxu0 0.0
    %535 = vmatpush2.msra.mxu0 %v140
    %536 = vmatprep.subr.mxu0 0.0
    %537 = vmatpush2.msra.mxu0 %v139
    %538 = vmatprep.mubr.f32.mxu0 %v78
    %539 = vmatmul.mubr.f32.gmra.mxu0 %v77
    %v540 = vpop.f32.mrf.mxu0
    %v541 = vadd.f32 %v456, %v540
    %v542 = vpop.f32.mrf.mxu0
    %543 = vmatprep.mubr.f32.mxu0 %v82
    %544 = vmatmul.mubr.f32.gmra.mxu0 %v81
    %v545 = vpop.f32.mrf.mxu0
    %v546 = vadd.f32 %v461, %v545
    %v547 = vpop.f32.mrf.mxu0
    %548 = vmatprep.mubr.f32.mxu0 %v86
    %549 = vmatmul.mubr.f32.gmra.mxu0 %v85
    %v550 = vpop.f32.mrf.mxu0
    %v551 = vadd.f32 %v466, %v550
    %v552 = vpop.f32.mrf.mxu0
    %553 = vmatprep.mubr.f32.mxu0 %v90
    %554 = vmatmul.mubr.f32.gmra.mxu0 %v89
    %v555 = vpop.f32.mrf.mxu0
    %v556 = vadd.f32 %v471, %v555
    %v557 = vpop.f32.mrf.mxu0
    %558 = vdwg.mxu0
    %v559 = vld [vmem:[%s3] sm:$0x1]
    %v561 = vlaneseq
    %v562 = vshrl.u32 %v561, 7
    %v563 = vsub.s32 0, %v562
    %v564 = vrot.slane %v559, %v563
    %v566 = vadd.f32 %v541, %v564
    %v567 = vadd.f32 %v546, %v564
    %v568 = vadd.f32 %v551, %v564
    %v569 = vadd.f32 %v556, %v564
    %570 = vst [vmem:[#allocation8] sm:$0xff] %v566
    %571 = vst [vmem:[#allocation8 + $0x8] sm:$0xff] %v567
    %572 = vst [vmem:[#allocation8 + $0x10] sm:$0xff] %v568
    %573 = vst [vmem:[#allocation8 + $0x18] sm:$0xff] %v569
    // Predicated region
    $region30: #{tpu_custom_call.1} parent=1 // pred_check
      _
    $region31: #{tpu_custom_call.1} parent=1 // pred_check_branch
      %575 = sbr.rel (0) target = $region33
    $region32: #{tpu_custom_call.1} parent=1 // pred_region
      %s577 = ssub.s32 512, 512
      %578 = vsyncadd [#allocation4], %s577
      %s579 = sshll.u32 [#allocation8], 4
      %s580 = int_to_ptr.vmem [resolvable:$true] %s579
      %585 = dma.vmem_to_hbm [thread:$0]  %s580, 512, %s4, [#allocation4], 128, 128, 8
    $region33: #{tpu_custom_call.1} parent=1 // pred_fallthru
      _
    // Predicated region
    $region34: #{tpu_custom_call.1} parent=1 // pred_check
      _
    $region35: #{tpu_custom_call.1} parent=1 // pred_check_branch
      %587 = sbr.rel (0) target = $region37
    $region36: #{tpu_custom_call.1} parent=1 // pred_region
      %588 = dma.done [#allocation4], 512
    $region37: #{tpu_custom_call.1} parent=1 // pred_fallthru
      _
    %589 = vsyncpa [#allocation3], 1
    %590 = vsyncpa [#allocation6], 1
    %591 = vsyncpa [#allocation4], 1

</llo_original>
